<compile_context>
chip_gen: v6e
topology: v6e:2x2x1
jax: 0.10.0
libtpu: 0.0.40
codegen_flags: <defaults>
</compile_context>

<pallas_src>
import jax
import jax.numpy as jnp
from jax.experimental import pallas as pl
from jax.experimental.pallas import tpu as pltpu

_LANE_W = 512             # slab lane width (multiple of 128); 2 KiB f32 rows
_TARGET_BLOCK_ROWS = 1024  # 1024 x 512 f32 ~= 2 MiB per tile


def _min_sublane(dtype):
    itemsize = jnp.dtype(dtype).itemsize
    return {4: 8, 2: 16, 1: 32}.get(itemsize, 8)


def _power_kernel(mode_ref, coef_ref, x_ref, o_ref):
    # mode_ref / coef_ref live in SMEM (scalar prefetch); x_ref/o_ref are
    # (block_rows, 512) VMEM tiles.
    mode = mode_ref[0]

    @pl.when(mode == 1)        # a == 1.0  -> straight copy
    def _():
        o_ref[...] = x_ref[...]

    @pl.when(mode == 2)        # a == 2.0  -> x*x (VPU only)
    def _():
        x = x_ref[...].astype(jnp.float32)
        o_ref[...] = (x * x).astype(o_ref.dtype)

    @pl.when(mode == 3)        # a == 0.5  -> sqrt
    def _():
        o_ref[...] = jnp.sqrt(x_ref[...].astype(jnp.float32)).astype(o_ref.dtype)

    @pl.when(mode == 4)        # a == -1.0 -> 1/x
    def _():
        o_ref[...] = pl.reciprocal(
            x_ref[...].astype(jnp.float32)).astype(o_ref.dtype)

    @pl.when(mode == 5)        # a == 0.0  -> ones (torch: 0**0 == 1)
    def _():
        o_ref[...] = jnp.ones_like(x_ref[...])

    @pl.when(mode == 0)        # general exponent: exp(a*log(x)) on the EUP
    def _():
        a = coef_ref[0]
        x = x_ref[...].astype(jnp.float32)
        o_ref[...] = jnp.power(x, a).astype(o_ref.dtype)


def power_forward(x, coefs):
    """y = x ** coefs[0], same shape/dtype as x (Pallas TPU)."""
    orig_shape = x.shape
    dtype = x.dtype
    n = x.size
    itemsize = jnp.dtype(dtype).itemsize
    sub = _min_sublane(dtype)

    rows = pl.cdiv(n, _LANE_W)
    rows_aligned = pl.cdiv(rows, sub) * sub

    if rows_aligned > sub:
        # Target ~2 MiB tiles but keep >=2 grid steps so v7x's two TCs both
        # get a share of the row-tiles.
        block_rows = min(_TARGET_BLOCK_ROWS,
                         pl.cdiv(rows_aligned, 2 * sub) * sub)
    else:
        block_rows = sub

    rows_p = pl.cdiv(rows, block_rows) * block_rows
    pad = rows_p * _LANE_W - n

    # Fast-path selector computed once outside the kernel (scalar-only work).
    a0 = coefs[0].astype(jnp.float32)
    mode = jnp.int32(0)
    mode = jnp.where(a0 == 0.0, 5, mode)
    mode = jnp.where(a0 == -1.0, 4, mode)
    mode = jnp.where(a0 == 0.5, 3, mode)
    mode = jnp.where(a0 == 2.0, 2, mode)
    mode = jnp.where(a0 == 1.0, 1, mode)
    mode = mode.astype(jnp.int32).reshape(1)

    xf = x.reshape(-1)
    if pad:
        # Pad with ones: 1**a is finite for every exponent; the padded region
        # is sliced away after the kernel. Skipped entirely when pad == 0.
        xf = jnp.concatenate([xf, jnp.ones((pad,), dtype)])
    xf = xf.reshape(rows_p, _LANE_W)

    out = pl.pallas_call(
        _power_kernel,
        out_shape=jax.ShapeDtypeStruct((rows_p, _LANE_W), dtype),
        grid_spec=pltpu.PrefetchScalarGridSpec(
            num_scalar_prefetch=2,                      # mode, coefs -> SMEM
            grid=(rows_p // block_rows,),
            in_specs=[pl.BlockSpec((block_rows, _LANE_W),
                                   lambda i, mode, coef: (i, 0))],
            out_specs=pl.BlockSpec((block_rows, _LANE_W),
                                   lambda i, mode, coef: (i, 0)),
        ),
        compiler_params=pltpu.CompilerParams(
            dimension_semantics=("parallel",),
        ),
        cost_estimate=pl.CostEstimate(
            flops=n,
            transcendentals=2 * n,
            bytes_accessed=2 * n * itemsize,
        ),
    )(mode, coefs, xf)

    flat = out.reshape(-1)
    if pad:
        flat = flat[:n]
    return flat.reshape(orig_shape)


if __name__ == "__main__":
    # Deterministic parameter init, mirroring nn.Parameter(torch.tensor([1.0])).
    coefs = jnp.array([1.0], dtype=jnp.float32)

    key = jax.random.PRNGKey(0)
    x = jax.random.normal(key, (2, 4, 16, 16), dtype=jnp.float32)  # NCHW

    y = power_forward(x, coefs)
    jax.block_until_ready(y)

    # Module default a = 1.0: exact copy (also correct for negative inputs).
    assert y.shape == x.shape and y.dtype == x.dtype
    assert jnp.allclose(y, x, atol=1e-6, rtol=1e-6)

    # Exercise the a = 2.0 fast path as well.
    y2 = power_forward(x, jnp.array([2.0], dtype=jnp.float32))
    jax.block_until_ready(y2)
    assert jnp.allclose(y2, x * x, atol=1e-5, rtol=1e-5)

    print("KERNEL_OK")
</pallas_src>

<mosaic_0001>
module attributes {stable_mosaic.version = 11 : i64} {
  func.func @_power_kernel(%arg0: i32, %arg1: memref<1xi32, #tpu.memory_space<smem>>, %arg2: memref<1xf32, #tpu.memory_space<smem>>, %arg3: memref<8x512xf32, #tpu.memory_space<vmem>>, %arg4: memref<8x512xf32, #tpu.memory_space<vmem>>) attributes {dimension_semantics = [#tpu.dimension_semantics<parallel>], iteration_bounds = array<i64: 1>, scalar_prefetch = 2 : i64, scratch_operands = 0 : i64, tpu.core_type = #tpu.core_type<tc>, window_params = [{transform_indices = @transform_0, window_bounds = array<i64: 8, 512>}, {transform_indices = @transform_1, window_bounds = array<i64: 8, 512>}]} {
    %c0 = arith.constant 0 : index
    %0 = memref.load %arg1[%c0] : memref<1xi32, #tpu.memory_space<smem>>
    %c1_i32 = arith.constant 1 : i32
    %1 = arith.cmpi eq, %0, %c1_i32 : i32
    %2 = arith.extui %1 : i1 to i32
    %c0_i32 = arith.constant 0 : i32
    %3 = arith.cmpi ne, %2, %c0_i32 : i32
    scf.if %3 {
      %c0_6 = arith.constant 0 : index
      %c0_7 = arith.constant 0 : index
      %19 = vector.load %arg3[%c0_6, %c0_7] : memref<8x512xf32, #tpu.memory_space<vmem>>, vector<8x512xf32>
      %c0_8 = arith.constant 0 : index
      %c0_9 = arith.constant 0 : index
      %20 = vector.load %arg4[%c0_8, %c0_9] : memref<8x512xf32, #tpu.memory_space<vmem>>, vector<8x512xf32>
      tpu.vector_store %arg4[%c0_8, %c0_9], %19 {strides = array<i32>} : memref<8x512xf32, #tpu.memory_space<vmem>>, vector<8x512xf32>,
    } else {
    }
    %c2_i32 = arith.constant 2 : i32
    %4 = arith.cmpi eq, %0, %c2_i32 : i32
    %5 = arith.extui %4 : i1 to i32
    %c0_i32_0 = arith.constant 0 : i32
    %6 = arith.cmpi ne, %5, %c0_i32_0 : i32
    scf.if %6 {
      %c0_6 = arith.constant 0 : index
      %c0_7 = arith.constant 0 : index
      %19 = vector.load %arg3[%c0_6, %c0_7] : memref<8x512xf32, #tpu.memory_space<vmem>>, vector<8x512xf32>
      %20 = arith.mulf %19, %19 : vector<8x512xf32>
      %c0_8 = arith.constant 0 : index
      %c0_9 = arith.constant 0 : index
      %21 = vector.load %arg4[%c0_8, %c0_9] : memref<8x512xf32, #tpu.memory_space<vmem>>, vector<8x512xf32>
      tpu.vector_store %arg4[%c0_8, %c0_9], %20 {strides = array<i32>} : memref<8x512xf32, #tpu.memory_space<vmem>>, vector<8x512xf32>,
    } else {
    }
    %c3_i32 = arith.constant 3 : i32
    %7 = arith.cmpi eq, %0, %c3_i32 : i32
    %8 = arith.extui %7 : i1 to i32
    %c0_i32_1 = arith.constant 0 : i32
    %9 = arith.cmpi ne, %8, %c0_i32_1 : i32
    scf.if %9 {
      %c0_6 = arith.constant 0 : index
      %c0_7 = arith.constant 0 : index
      %19 = vector.load %arg3[%c0_6, %c0_7] : memref<8x512xf32, #tpu.memory_space<vmem>>, vector<8x512xf32>
      %20 = math.sqrt %19 : vector<8x512xf32>
      %c0_8 = arith.constant 0 : index
      %c0_9 = arith.constant 0 : index
      %21 = vector.load %arg4[%c0_8, %c0_9] : memref<8x512xf32, #tpu.memory_space<vmem>>, vector<8x512xf32>
      tpu.vector_store %arg4[%c0_8, %c0_9], %20 {strides = array<i32>} : memref<8x512xf32, #tpu.memory_space<vmem>>, vector<8x512xf32>,
    } else {
    }
    %c4_i32 = arith.constant 4 : i32
    %10 = arith.cmpi eq, %0, %c4_i32 : i32
    %11 = arith.extui %10 : i1 to i32
    %c0_i32_2 = arith.constant 0 : i32
    %12 = arith.cmpi ne, %11, %c0_i32_2 : i32
    scf.if %12 {
      %c0_6 = arith.constant 0 : index
      %c0_7 = arith.constant 0 : index
      %19 = vector.load %arg3[%c0_6, %c0_7] : memref<8x512xf32, #tpu.memory_space<vmem>>, vector<8x512xf32>
      %20 = tpu.reciprocal %19 : vector<8x512xf32> -> vector<8x512xf32>
      %c0_8 = arith.constant 0 : index
      %c0_9 = arith.constant 0 : index
      %21 = vector.load %arg4[%c0_8, %c0_9] : memref<8x512xf32, #tpu.memory_space<vmem>>, vector<8x512xf32>
      tpu.vector_store %arg4[%c0_8, %c0_9], %20 {strides = array<i32>} : memref<8x512xf32, #tpu.memory_space<vmem>>, vector<8x512xf32>,
    } else {
    }
    %c5_i32 = arith.constant 5 : i32
    %13 = arith.cmpi eq, %0, %c5_i32 : i32
    %14 = arith.extui %13 : i1 to i32
    %c0_i32_3 = arith.constant 0 : i32
    %15 = arith.cmpi ne, %14, %c0_i32_3 : i32
    scf.if %15 {
      %cst = arith.constant 1.000000e+00 : f32
      %19 = vector.broadcast %cst : f32 to vector<8x512xf32>
      %c0_6 = arith.constant 0 : index
      %c0_7 = arith.constant 0 : index
      %20 = vector.load %arg4[%c0_6, %c0_7] : memref<8x512xf32, #tpu.memory_space<vmem>>, vector<8x512xf32>
      tpu.vector_store %arg4[%c0_6, %c0_7], %19 {strides = array<i32>} : memref<8x512xf32, #tpu.memory_space<vmem>>, vector<8x512xf32>,
    } else {
    }
    %c0_i32_4 = arith.constant 0 : i32
    %16 = arith.cmpi eq, %0, %c0_i32_4 : i32
    %17 = arith.extui %16 : i1 to i32
    %c0_i32_5 = arith.constant 0 : i32
    %18 = arith.cmpi ne, %17, %c0_i32_5 : i32
    scf.if %18 {
      %c0_6 = arith.constant 0 : index
      %19 = memref.load %arg2[%c0_6] : memref<1xf32, #tpu.memory_space<smem>>
      %c0_7 = arith.constant 0 : index
      %c0_8 = arith.constant 0 : index
      %20 = vector.load %arg3[%c0_7, %c0_8] : memref<8x512xf32, #tpu.memory_space<vmem>>, vector<8x512xf32>
      %21 = vector.broadcast %19 : f32 to vector<8x512xf32>
      %22 = math.powf %20, %21 : vector<8x512xf32>
      %c0_9 = arith.constant 0 : index
      %c0_10 = arith.constant 0 : index
      %23 = vector.load %arg4[%c0_9, %c0_10] : memref<8x512xf32, #tpu.memory_space<vmem>>, vector<8x512xf32>
      tpu.vector_store %arg4[%c0_9, %c0_10], %22 {strides = array<i32>} : memref<8x512xf32, #tpu.memory_space<vmem>>, vector<8x512xf32>,
    } else {
    }
    return
  }
  func.func @transform_0(%arg0: i32, %arg1: memref<1xi32, #tpu.memory_space<smem>>, %arg2: memref<1xf32, #tpu.memory_space<smem>>) -> (i32, i32) {
    %c0_i32 = arith.constant 0 : i32
    %c0_i32_0 = arith.constant 0 : i32
    return %arg0, %c0_i32 : i32, i32
  }
  func.func @transform_1(%arg0: i32, %arg1: memref<1xi32, #tpu.memory_space<smem>>, %arg2: memref<1xf32, #tpu.memory_space<smem>>) -> (i32, i32) {
    %c0_i32 = arith.constant 0 : i32
    %c0_i32_0 = arith.constant 0 : i32
    return %arg0, %c0_i32 : i32, i32
  }
}

</mosaic_0001>

<llo_original>
// kernel: tpu_custom_call.1
$region0: #{tpu_custom_call.1}
  #allocation0 [shape = 'u32[]', space=smem, size = 0x4, offset = 0x4, fixed_abs, tag = 'smem constant byte address 0x4 - core index']
  #allocation1 [shape = 'u32[144,128]{1,0:T(1,128)}', space=vmem, size = 0x12000, scoped, tag = 'internal scratch']
  #allocation2 [shape = 's32[1]{0}', space=sflag, size = 0x4, scoped, tag = 'scoped memory for tpu_custom_call.1']
  #allocation3 [shape = 's32[1]{0:T(128)S(6)}', space=smem, size = 0x200, scoped, tag = 'prefetched SMEM operand 0']
  #allocation4 [shape = 'f32[1]{0:T(128)S(6)}', space=smem, size = 0x200, scoped, tag = 'prefetched SMEM operand 1']
  %s0 = inlined_call_operand.<no memory space> [shape: s32[1], index: 0, kind: input, shape index: {}]
  %s1 = inlined_call_operand.<no memory space> [shape: f32[1], index: 1, kind: input, shape index: {}]
  %s2 = inlined_call_operand.hbm [shape: f32[8,512], index: 2, kind: input, shape index: {}]
  %s3 = inlined_call_operand.hbm [shape: f32[8,512], index: 3, kind: output, shape index: {}]
  %s4 = sld [smem:[#allocation0]]
  $region42: #{tpu_custom_call.1} parent=0
    _
  %s6 = ssub.s32 1, %s4
  %s7 = scalar_select 0, %s6, %s4
  %8 = sst [smem:[#allocation3]] %s0
  %9 = sst [smem:[#allocation4]] %s1
  $region1: #{tpu_custom_call.1} parent=0
    #allocation5 [shape = 'u8[16384]{0}', space=vmem, size = 0x4000, scoped, tag = 'input window, operand 2, single buffered']
    #allocation6 [shape = 's32[1]{0}', space=sflag, size = 0x4, scoped, tag = 'scoped memory for tpu_custom_call.1']
    #allocation7 [shape = 's32[1]{0}', space=sflag, size = 0x4, scoped, tag = 'scoped memory for tpu_custom_call.1']
    #allocation8 [shape = 'u8[16384]{0}', space=vmem, size = 0x4000, scoped, tag = 'output window, operand 0, single buffered']
    %10 = vsyncpa [#allocation6], 0
    %11 = vsyncpa [#allocation7], 0
    // Predicated region
    $region2: #{tpu_custom_call.1} parent=1 // pred_check
      _
    $region3: #{tpu_custom_call.1} parent=1 // pred_check_branch
      %13 = sbr.rel (0) target = $region5
    $region4: #{tpu_custom_call.1} parent=1 // pred_region
      %s15 = ssub.s32 512, 512
      %16 = vsyncadd [#allocation6], %s15
      %s18 = sshll.u32 [#allocation5], 4
      %s19 = int_to_ptr.vmem [resolvable:$true] %s18
      %21 = dma.hbm_to_vmem [thread:$0]  %s2, 512, %s19, [#allocation6]
    $region5: #{tpu_custom_call.1} parent=1 // pred_fallthru
      _
    // Predicated region
    $region6: #{tpu_custom_call.1} parent=1 // pred_check
      _
    $region7: #{tpu_custom_call.1} parent=1 // pred_check_branch
      %23 = sbr.rel (0) target = $region9
    $region8: #{tpu_custom_call.1} parent=1 // pred_region
      %24 = dma.done [#allocation6], 512
    $region9: #{tpu_custom_call.1} parent=1 // pred_fallthru
      _
    %s25 = sld [smem:[#allocation3]]
    %p26 = scmp.eq.s32.totalorder %s25, 1
    // Predicated region
    $region10: #{tpu_custom_call.1} parent=1 // pred_check
      %p27 = pneg %p26
    $region11: #{tpu_custom_call.1} parent=1 // pred_check_branch
      %29 = sbr.rel (%p27) target = $region13
    $region12: #{tpu_custom_call.1} parent=1 // pred_region
      %v30 = vld [vmem:[#allocation5] sm:$0xff]
      %v31 = vld [vmem:[#allocation5 + $0x8] sm:$0xff]
      %v32 = vld [vmem:[#allocation5 + $0x10] sm:$0xff]
      %v33 = vld [vmem:[#allocation5 + $0x18] sm:$0xff]
      %34 = vst [vmem:[#allocation8] sm:$0xff] %v30
      %35 = vst [vmem:[#allocation8 + $0x8] sm:$0xff] %v31
      %36 = vst [vmem:[#allocation8 + $0x10] sm:$0xff] %v32
      %37 = vst [vmem:[#allocation8 + $0x18] sm:$0xff] %v33
    $region13: #{tpu_custom_call.1} parent=1 // pred_fallthru
      _
    %p38 = scmp.eq.s32.totalorder %s25, 2
    // Predicated region
    $region14: #{tpu_custom_call.1} parent=1 // pred_check
      %p39 = pneg %p38
    $region15: #{tpu_custom_call.1} parent=1 // pred_check_branch
      %41 = sbr.rel (%p39) target = $region17
    $region16: #{tpu_custom_call.1} parent=1 // pred_region
      %v42 = vld [vmem:[#allocation5] sm:$0xff]
      %v43 = vld [vmem:[#allocation5 + $0x8] sm:$0xff]
      %v44 = vld [vmem:[#allocation5 + $0x10] sm:$0xff]
      %v45 = vld [vmem:[#allocation5 + $0x18] sm:$0xff]
      %v46 = vmul.f32 %v42, %v42
      %v47 = vmul.f32 %v43, %v43
      %v48 = vmul.f32 %v44, %v44
      %v49 = vmul.f32 %v45, %v45
      %50 = vst [vmem:[#allocation8] sm:$0xff] %v46
      %51 = vst [vmem:[#allocation8 + $0x8] sm:$0xff] %v47
      %52 = vst [vmem:[#allocation8 + $0x10] sm:$0xff] %v48
      %53 = vst [vmem:[#allocation8 + $0x18] sm:$0xff] %v49
    $region17: #{tpu_custom_call.1} parent=1 // pred_fallthru
      _
    %p54 = scmp.eq.s32.totalorder %s25, 3
    // Predicated region
    $region18: #{tpu_custom_call.1} parent=1 // pred_check
      %p55 = pneg %p54
    $region19: #{tpu_custom_call.1} parent=1 // pred_check_branch
      %57 = sbr.rel (%p55) target = $region21
    $region20: #{tpu_custom_call.1} parent=1 // pred_region
      %v58 = vld [vmem:[#allocation5] sm:$0xff]
      %v59 = vld [vmem:[#allocation5 + $0x8] sm:$0xff]
      %v60 = vld [vmem:[#allocation5 + $0x10] sm:$0xff]
      %v61 = vld [vmem:[#allocation5 + $0x18] sm:$0xff]
      %v62 = vrsqrt.pop %v58
      %v63 = vmul.f32 %v58, %v62
      %vm64 = vcmp.eq.f32.partialorder %v58, inf
      %v65 = vsel %vm64, %v58, %v63
      %vm66 = vcmp.eq.f32.partialorder %v58, 0.0
      %v67 = vand.u32 %v58, 2147483648
      %v68 = vsel %vm66, %v67, %v65
      %v69 = vrsqrt.pop %v59
      %v70 = vmul.f32 %v59, %v69
      %vm71 = vcmp.eq.f32.partialorder %v59, inf
      %v72 = vsel %vm71, %v59, %v70
      %vm73 = vcmp.eq.f32.partialorder %v59, 0.0
      %v74 = vand.u32 %v59, 2147483648
      %v75 = vsel %vm73, %v74, %v72
      %v76 = vrsqrt.pop %v60
      %v77 = vmul.f32 %v60, %v76
      %vm78 = vcmp.eq.f32.partialorder %v60, inf
      %v79 = vsel %vm78, %v60, %v77
      %vm80 = vcmp.eq.f32.partialorder %v60, 0.0
      %v81 = vand.u32 %v60, 2147483648
      %v82 = vsel %vm80, %v81, %v79
      %v83 = vrsqrt.pop %v61
      %v84 = vmul.f32 %v61, %v83
      %vm85 = vcmp.eq.f32.partialorder %v61, inf
      %v86 = vsel %vm85, %v61, %v84
      %vm87 = vcmp.eq.f32.partialorder %v61, 0.0
      %v88 = vand.u32 %v61, 2147483648
      %v89 = vsel %vm87, %v88, %v86
      %90 = vst [vmem:[#allocation8] sm:$0xff] %v68
      %91 = vst [vmem:[#allocation8 + $0x8] sm:$0xff] %v75
      %92 = vst [vmem:[#allocation8 + $0x10] sm:$0xff] %v82
      %93 = vst [vmem:[#allocation8 + $0x18] sm:$0xff] %v89
    $region21: #{tpu_custom_call.1} parent=1 // pred_fallthru
      _
    %p94 = scmp.eq.s32.totalorder %s25, 4
    // Predicated region
    $region22: #{tpu_custom_call.1} parent=1 // pred_check
      %p95 = pneg %p94
    $region23: #{tpu_custom_call.1} parent=1 // pred_check_branch
      %97 = sbr.rel (%p95) target = $region25
    $region24: #{tpu_custom_call.1} parent=1 // pred_region
      %v98 = vld [vmem:[#allocation5] sm:$0xff]
      %v99 = vld [vmem:[#allocation5 + $0x8] sm:$0xff]
      %v100 = vld [vmem:[#allocation5 + $0x10] sm:$0xff]
      %v101 = vld [vmem:[#allocation5 + $0x18] sm:$0xff]
      %v102 = vrcp.pop %v98
      %v103 = vrcp.pop %v99
      %v104 = vrcp.pop %v100
      %v105 = vrcp.pop %v101
      %106 = vst [vmem:[#allocation8] sm:$0xff] %v102
      %107 = vst [vmem:[#allocation8 + $0x8] sm:$0xff] %v103
      %108 = vst [vmem:[#allocation8 + $0x10] sm:$0xff] %v104
      %109 = vst [vmem:[#allocation8 + $0x18] sm:$0xff] %v105
    $region25: #{tpu_custom_call.1} parent=1 // pred_fallthru
      _
    %p110 = scmp.eq.s32.totalorder %s25, 5
    // Predicated region
    $region26: #{tpu_custom_call.1} parent=1 // pred_check
      %p111 = pneg %p110
    $region27: #{tpu_custom_call.1} parent=1 // pred_check_branch
      %113 = sbr.rel (%p111) target = $region29
    $region28: #{tpu_custom_call.1} parent=1 // pred_region
      %114 = vst [vmem:[#allocation8] sm:$0xff] 1.0
      %115 = vst [vmem:[#allocation8 + $0x8] sm:$0xff] 1.0
      %116 = vst [vmem:[#allocation8 + $0x10] sm:$0xff] 1.0
      %117 = vst [vmem:[#allocation8 + $0x18] sm:$0xff] 1.0
    $region29: #{tpu_custom_call.1} parent=1 // pred_fallthru
      _
    %p118 = scmp.eq.s32.totalorder %s25, 0
    // Predicated region
    $region30: #{tpu_custom_call.1} parent=1 // pred_check
      %p119 = pneg %p118
    $region31: #{tpu_custom_call.1} parent=1 // pred_check_branch
      %121 = sbr.rel (%p119) target = $region33
    $region32: #{tpu_custom_call.1} parent=1 // pred_region
      %s122 = sld [smem:[#allocation4]]
      %v123 = vld [vmem:[#allocation5] sm:$0xff]
      %v124 = vld [vmem:[#allocation5 + $0x8] sm:$0xff]
      %v125 = vld [vmem:[#allocation5 + $0x10] sm:$0xff]
      %v126 = vld [vmem:[#allocation5 + $0x18] sm:$0xff]
      %v127 = vstv %s122
      %v128 = vpow.f32 %v123, %v127
      %v129 = vpow.f32 %v124, %v127
      %v130 = vpow.f32 %v125, %v127
      %v131 = vpow.f32 %v126, %v127
      %132 = vst [vmem:[#allocation8] sm:$0xff] %v128
      %133 = vst [vmem:[#allocation8 + $0x8] sm:$0xff] %v129
      %134 = vst [vmem:[#allocation8 + $0x10] sm:$0xff] %v130
      %135 = vst [vmem:[#allocation8 + $0x18] sm:$0xff] %v131
    $region33: #{tpu_custom_call.1} parent=1 // pred_fallthru
      _
    // Predicated region
    $region34: #{tpu_custom_call.1} parent=1 // pred_check
      _
    $region35: #{tpu_custom_call.1} parent=1 // pred_check_branch
      %137 = sbr.rel (0) target = $region37
    $region36: #{tpu_custom_call.1} parent=1 // pred_region
      %s139 = ssub.s32 512, 512
      %140 = vsyncadd [#allocation7], %s139
      %s142 = sshll.u32 [#allocation8], 4
      %s143 = int_to_ptr.vmem [resolvable:$true] %s142
      %145 = dma.vmem_to_hbm [thread:$0]  %s143, 512, %s3, [#allocation7]
    $region37: #{tpu_custom_call.1} parent=1 // pred_fallthru
      _
    // Predicated region
    $region38: #{tpu_custom_call.1} parent=1 // pred_check
      _
    $region39: #{tpu_custom_call.1} parent=1 // pred_check_branch
      %147 = sbr.rel (0) target = $region41
    $region40: #{tpu_custom_call.1} parent=1 // pred_region
      %148 = dma.done [#allocation7], 512
    $region41: #{tpu_custom_call.1} parent=1 // pred_fallthru
      _
    %149 = vsyncpa [#allocation6], 1
    %150 = vsyncpa [#allocation7], 1

</llo_original>
